<compile_context>
chip_gen: v5e
topology: v5e:2x2
jax: 0.10.0
libtpu: 0.0.40
codegen_flags: <defaults>
</compile_context>

<pallas_src>
import functools

import jax
import jax.numpy as jnp
from jax import lax
from jax.experimental import pallas as pl
from jax.experimental.pallas import tpu as pltpu

_LANE = 128


def _dice_sums_kernel(logits_ref, target_ref, inter_ref, z_ref, y_ref, *,
                      apply_softmax, num_classes, tile_sub, valid_size, needs_mask):
    """Accumulates per-class (intersect, sum p^2, count t) per-lane partial sums.

    logits_ref: (1, C, T, 128) caller dtype
    target_ref: (1, 1, T, 128) int8/int32 labels
    inter_ref/z_ref/y_ref: (1, C, 128) f32 accumulators (output blocks resident
        in VMEM across the spatial grid axis).
    """
    si = pl.program_id(1)

    @pl.when(si == 0)
    def _():
        inter_ref[...] = jnp.zeros_like(inter_ref)
        z_ref[...] = jnp.zeros_like(z_ref)
        y_ref[...] = jnp.zeros_like(y_ref)

    x = logits_ref[0].astype(jnp.float32)       # (C, T, 128), f32 only in-kernel
    labels = target_ref[0].astype(jnp.int32)    # (1, T, 128)

    if apply_softmax:
        # Class axis is the leading (untiled) dim -> these reductions are plain
        # elementwise VALU work across fully packed (8,128) vregs.
        m = jnp.max(x, axis=0, keepdims=True)                      # (1, T, 128)
        e = jnp.exp(x - m)                                         # EUP
        inv = pl.reciprocal(jnp.sum(e, axis=0, keepdims=True))     # exact reciprocal
        p = e * inv                                                # (C, T, 128)
    else:
        p = x

    # Per-class membership without materializing a (B, C, H, W) one-hot tensor.
    cls = lax.broadcasted_iota(jnp.int32, (num_classes, tile_sub, _LANE), 0)
    onehot = labels == cls                                         # (C, T, 128) bool

    def accumulate(p_eff, onehot_eff):
        # Reduce only over the sublane axis; the single 128-wide cross-lane
        # reduce is deferred to the JAX wrapper epilogue.
        inter_ref[...] += jnp.sum(jnp.where(onehot_eff, p_eff, 0.0), axis=1)[None]
        z_ref[...] += jnp.sum(p_eff * p_eff, axis=1)[None]
        y_ref[...] += jnp.sum(onehot_eff.astype(jnp.float32), axis=1)[None]

    if needs_mask:
        # Only the final spatial tile can contain padded / out-of-bounds lanes.
        is_tail = si == pl.num_programs(1) - 1

        @pl.when(jnp.logical_not(is_tail))
        def _():
            accumulate(p, onehot)

        @pl.when(is_tail)
        def _():
            sub = lax.broadcasted_iota(jnp.int32, (1, tile_sub, _LANE), 1)
            ln = lax.broadcasted_iota(jnp.int32, (1, tile_sub, _LANE), 2)
            pos = (si * tile_sub + sub) * _LANE + ln
            valid = pos < valid_size
            accumulate(jnp.where(valid, p, 0.0), jnp.logical_and(onehot, valid))
    else:
        accumulate(p, onehot)


def dice_loss(logits, target, weight=None, softmax=True):
    """Pallas implementation of DiceLoss.forward.

    logits: [B, C, H, W] float (any float dtype; upcast to f32 in-kernel)
    target: [B, H, W] integer class labels
    weight: optional [C] per-class weights (default all-ones)
    returns: scalar float32
    """
    b, c, h, w = logits.shape
    s = h * w
    if weight is None:
        weight = jnp.ones((c,), jnp.float32)
    weight = jnp.asarray(weight, jnp.float32).reshape(c)

    # Compact label stream: 1 byte/pixel when the class count allows it.
    tgt_dtype = jnp.int8 if c <= 127 else jnp.int32
    target_n = jnp.asarray(target, tgt_dtype)

    s128 = -(-s // _LANE)                       # number of 128-lane rows
    if s % _LANE != 0:
        # TODO(synk): only hit when H*W is not 128-divisible; pads <128 elements
        # per row (padded labels alias class 0 but are neutralized by the mask).
        pad = s128 * _LANE - s
        logits3 = jnp.pad(logits.reshape(b, c, s), ((0, 0), (0, 0), (0, pad)))
        target3 = jnp.pad(target_n.reshape(b, 1, s), ((0, 0), (0, 0), (0, pad)))
    else:
        logits3 = logits.reshape(b, c, s)
        target3 = target_n.reshape(b, 1, s)
    # Contiguous (free) reshape: spatial -> rows of 128 lanes; the class axis
    # stays off the sublane dimension.
    logits4 = logits3.reshape(b, c, s128, _LANE)
    target4 = target3.reshape(b, 1, s128, _LANE)

    # ---- generation-aware tile / VMEM sizing ----
    try:
        vmem_cap = int(getattr(pltpu.get_tpu_info(), "vmem_capacity_bytes", 64 << 20))
    except Exception:
        vmem_cap = 64 << 20                     # conservative (v7x-sized) fallback
    # f32 working-tile budget per grid step.
    f32_tile_budget = (8 << 20) if vmem_cap >= (100 << 20) else (4 << 20)

    cap = max(8, f32_tile_budget // (c * _LANE * 4))
    if cap >= s128:
        t_sub = s128                            # single spatial tile (full extent)
    else:
        t_sub = max(32, (cap // 32) * 32)       # multiple of 32 (8-rule + int8 packing)
        t_sub = min(t_sub, s128)
    n_s = -(-s128 // t_sub)
    needs_mask = s != n_s * t_sub * _LANE

    itemsize = jnp.dtype(logits.dtype).itemsize
    f32_tile = c * t_sub * _LANE * 4
    in_bytes = (2 * c * t_sub * _LANE * itemsize
                + 2 * t_sub * _LANE * jnp.dtype(tgt_dtype).itemsize)
    out_bytes = 3 * 2 * c * _LANE * 4
    # Inputs (double-buffered) + ~5x f32 tile of live temporaries + headroom.
    vmem_limit = in_bytes + 5 * f32_tile + out_bytes + (2 << 20)
    vmem_limit = int(max(32 << 20, min(vmem_limit, vmem_cap - (8 << 20))))

    kernel = functools.partial(
        _dice_sums_kernel,
        apply_softmax=softmax,
        num_classes=c,
        tile_sub=t_sub,
        valid_size=s,
        needs_mask=needs_mask,
    )

    part_shape = jax.ShapeDtypeStruct((b, c, _LANE), jnp.float32)
    part_spec = pl.BlockSpec((1, c, _LANE), lambda bi, si: (bi, 0, 0))

    inter_p, z_p, y_p = pl.pallas_call(
        kernel,
        out_shape=(part_shape, part_shape, part_shape),
        grid=(b, n_s),
        in_specs=[
            pl.BlockSpec((1, c, t_sub, _LANE), lambda bi, si: (bi, 0, si, 0)),
            pl.BlockSpec((1, 1, t_sub, _LANE), lambda bi, si: (bi, 0, si, 0)),
        ],
        out_specs=(part_spec, part_spec, part_spec),
        compiler_params=pltpu.CompilerParams(
            # Per-batch partial outputs -> batch axis can be sharded across
            # TensorCores (v7x megacore); spatial axis accumulates in place.
            dimension_semantics=("parallel", "arbitrary"),
            vmem_limit_bytes=vmem_limit,
        ),
    )(logits4, target4)

    # Tiny epilogue in plain JAX: cross-lane/batch reduce + dice + weighting.
    intersect = jnp.sum(inter_p, axis=(0, 2))
    z_sum = jnp.sum(z_p, axis=(0, 2))
    y_sum = jnp.sum(y_p, axis=(0, 2))
    smooth = jnp.float32(1e-05)
    dice = 1.0 - (2.0 * intersect + smooth) / (z_sum + y_sum + smooth)
    return jnp.sum(dice * weight) / jnp.float32(c)


def _dice_loss_reference(logits, target, weight=None, softmax=True):
    # Pure-JAX reference mirroring the PyTorch module.
    b, c, h, w = logits.shape
    if weight is None:
        weight = jnp.ones((c,), jnp.float32)
    p = jax.nn.softmax(logits.astype(jnp.float32), axis=1) if softmax else logits.astype(jnp.float32)
    t = jax.nn.one_hot(target, c, axis=1, dtype=jnp.float32)
    smooth = 1e-05
    loss = 0.0
    for i in range(c):
        intersect = jnp.sum(p[:, i] * t[:, i])
        y_sum = jnp.sum(t[:, i] * t[:, i])
        z_sum = jnp.sum(p[:, i] * p[:, i])
        dice = 1.0 - (2.0 * intersect + smooth) / (z_sum + y_sum + smooth)
        loss = loss + dice * weight[i]
    return loss / c


if __name__ == "__main__":
    key = jax.random.PRNGKey(0)
    k1, k2 = jax.random.split(key)

    B, C, H, W = 2, 4, 16, 16
    logits = jax.random.normal(k1, (B, C, H, W), dtype=jnp.float32)
    target = jax.random.randint(k2, (B, H, W), 0, C, dtype=jnp.int32)

    out = jax.block_until_ready(dice_loss(logits, target))
    ref = jax.block_until_ready(_dice_loss_reference(logits, target))
    assert jnp.allclose(out, ref, atol=2e-5, rtol=2e-5), (out, ref)

    print("KERNEL_OK")
</pallas_src>

<mosaic_0001>
module attributes {stable_mosaic.version = 11 : i64} {
  func.func @_dice_sums_kernel(%arg0: i32, %arg1: i32, %arg2: memref<1x4x2x128xf32, #tpu.memory_space<vmem>>, %arg3: memref<1x1x2x128xi8, #tpu.memory_space<vmem>>, %arg4: memref<1x4x128xf32, #tpu.memory_space<vmem>>, %arg5: memref<1x4x128xf32, #tpu.memory_space<vmem>>, %arg6: memref<1x4x128xf32, #tpu.memory_space<vmem>>) attributes {dimension_semantics = [#tpu.dimension_semantics<parallel>, #tpu.dimension_semantics<arbitrary>], iteration_bounds = array<i64: 2, 1>, scalar_prefetch = 0 : i64, scratch_operands = 0 : i64, tpu.core_type = #tpu.core_type<tc>, window_params = [{transform_indices = @transform_0, window_bounds = array<i64: 1, 4, 2, 128>}, {transform_indices = @transform_1, window_bounds = array<i64: 1, 1, 2, 128>}, {transform_indices = @transform_2, window_bounds = array<i64: 1, 4, 128>}, {transform_indices = @transform_3, window_bounds = array<i64: 1, 4, 128>}, {transform_indices = @transform_4, window_bounds = array<i64: 1, 4, 128>}]} {
    %c0_i32 = arith.constant 0 : i32
    %0 = arith.cmpi eq, %arg1, %c0_i32 : i32
    %1 = arith.extui %0 : i1 to i32
    %c0_i32_0 = arith.constant 0 : i32
    %2 = arith.cmpi ne, %1, %c0_i32_0 : i32
    scf.if %2 {
      %cst_31 = arith.constant 0.000000e+00 : f32
      %41 = vector.broadcast %cst_31 : f32 to vector<1x4x128xf32>
      %c0_32 = arith.constant 0 : index
      %c0_33 = arith.constant 0 : index
      %c0_34 = arith.constant 0 : index
      %42 = vector.load %arg4[%c0_32, %c0_33, %c0_34] : memref<1x4x128xf32, #tpu.memory_space<vmem>>, vector<1x4x128xf32>
      tpu.vector_store %arg4[%c0_32, %c0_33, %c0_34], %41 {strides = array<i32>} : memref<1x4x128xf32, #tpu.memory_space<vmem>>, vector<1x4x128xf32>,
      %cst_35 = arith.constant 0.000000e+00 : f32
      %43 = vector.broadcast %cst_35 : f32 to vector<1x4x128xf32>
      %c0_36 = arith.constant 0 : index
      %c0_37 = arith.constant 0 : index
      %c0_38 = arith.constant 0 : index
      %44 = vector.load %arg5[%c0_36, %c0_37, %c0_38] : memref<1x4x128xf32, #tpu.memory_space<vmem>>, vector<1x4x128xf32>
      tpu.vector_store %arg5[%c0_36, %c0_37, %c0_38], %43 {strides = array<i32>} : memref<1x4x128xf32, #tpu.memory_space<vmem>>, vector<1x4x128xf32>,
      %cst_39 = arith.constant 0.000000e+00 : f32
      %45 = vector.broadcast %cst_39 : f32 to vector<1x4x128xf32>
      %c0_40 = arith.constant 0 : index
      %c0_41 = arith.constant 0 : index
      %c0_42 = arith.constant 0 : index
      %46 = vector.load %arg6[%c0_40, %c0_41, %c0_42] : memref<1x4x128xf32, #tpu.memory_space<vmem>>, vector<1x4x128xf32>
      tpu.vector_store %arg6[%c0_40, %c0_41, %c0_42], %45 {strides = array<i32>} : memref<1x4x128xf32, #tpu.memory_space<vmem>>, vector<1x4x128xf32>,
    } else {
    }
    %c0 = arith.constant 0 : index
    %c0_1 = arith.constant 0 : index
    %c0_2 = arith.constant 0 : index
    %c0_3 = arith.constant 0 : index
    %3 = vector.load %arg2[%c0, %c0_1, %c0_2, %c0_3] : memref<1x4x2x128xf32, #tpu.memory_space<vmem>>, vector<1x4x2x128xf32>
    %4 = vector.shape_cast %3 : vector<1x4x2x128xf32> to vector<4x2x128xf32>
    %c0_4 = arith.constant 0 : index
    %c0_5 = arith.constant 0 : index
    %c0_6 = arith.constant 0 : index
    %c0_7 = arith.constant 0 : index
    %5 = vector.load %arg3[%c0_4, %c0_5, %c0_6, %c0_7] : memref<1x1x2x128xi8, #tpu.memory_space<vmem>>, vector<1x1x2x128xi8>
    %6 = vector.shape_cast %5 : vector<1x1x2x128xi8> to vector<1x2x128xi8>
    %7 = arith.extsi %6 : vector<1x2x128xi8> to vector<1x2x128xi32>
    %cst = arith.constant dense<0xFF800000> : vector<2x128xf32>
    %8 = vector.multi_reduction <maximumf>, %4, %cst [0] : vector<4x2x128xf32> to vector<2x128xf32>
    %9 = vector.shape_cast %8 : vector<2x128xf32> to vector<1x2x128xf32>
    %10 = vector.broadcast %9 : vector<1x2x128xf32> to vector<4x2x128xf32>
    %11 = arith.subf %4, %10 : vector<4x2x128xf32>
    %12 = math.exp %11 : vector<4x2x128xf32>
    %cst_8 = arith.constant dense<0.000000e+00> : vector<2x128xf32>
    %13 = vector.multi_reduction <add>, %12, %cst_8 [0] : vector<4x2x128xf32> to vector<2x128xf32>
    %14 = vector.shape_cast %13 : vector<2x128xf32> to vector<1x2x128xf32>
    %15 = tpu.reciprocal %14 : vector<1x2x128xf32> -> vector<1x2x128xf32>
    %16 = vector.broadcast %15 : vector<1x2x128xf32> to vector<4x2x128xf32>
    %17 = arith.mulf %12, %16 : vector<4x2x128xf32>
    %18 = tpu.iota {dimensions = array<i32: 0>} : vector<4x2x128xi32>
    %19 = vector.broadcast %7 : vector<1x2x128xi32> to vector<4x2x128xi32>
    %20 = arith.cmpi eq, %19, %18 : vector<4x2x128xi32>
    %c0_9 = arith.constant 0 : index
    %c0_10 = arith.constant 0 : index
    %c0_11 = arith.constant 0 : index
    %21 = vector.load %arg4[%c0_9, %c0_10, %c0_11] : memref<1x4x128xf32, #tpu.memory_space<vmem>>, vector<1x4x128xf32>
    %cst_12 = arith.constant 0.000000e+00 : f32
    %22 = vector.broadcast %cst_12 : f32 to vector<4x2x128xf32>
    %23 = arith.select %20, %17, %22 : vector<4x2x128xi1>, vector<4x2x128xf32>
    %cst_13 = arith.constant dense<0.000000e+00> : vector<4x128xf32>
    %24 = vector.multi_reduction <add>, %23, %cst_13 [1] : vector<4x2x128xf32> to vector<4x128xf32>
    %25 = vector.shape_cast %24 : vector<4x128xf32> to vector<1x4x128xf32>
    %26 = arith.addf %21, %25 : vector<1x4x128xf32>
    %c0_14 = arith.constant 0 : index
    %c0_15 = arith.constant 0 : index
    %c0_16 = arith.constant 0 : index
    %27 = vector.load %arg4[%c0_14, %c0_15, %c0_16] : memref<1x4x128xf32, #tpu.memory_space<vmem>>, vector<1x4x128xf32>
    tpu.vector_store %arg4[%c0_14, %c0_15, %c0_16], %26 {strides = array<i32>} : memref<1x4x128xf32, #tpu.memory_space<vmem>>, vector<1x4x128xf32>,
    %c0_17 = arith.constant 0 : index
    %c0_18 = arith.constant 0 : index
    %c0_19 = arith.constant 0 : index
    %28 = vector.load %arg5[%c0_17, %c0_18, %c0_19] : memref<1x4x128xf32, #tpu.memory_space<vmem>>, vector<1x4x128xf32>
    %29 = arith.mulf %17, %17 : vector<4x2x128xf32>
    %cst_20 = arith.constant dense<0.000000e+00> : vector<4x128xf32>
    %30 = vector.multi_reduction <add>, %29, %cst_20 [1] : vector<4x2x128xf32> to vector<4x128xf32>
    %31 = vector.shape_cast %30 : vector<4x128xf32> to vector<1x4x128xf32>
    %32 = arith.addf %28, %31 : vector<1x4x128xf32>
    %c0_21 = arith.constant 0 : index
    %c0_22 = arith.constant 0 : index
    %c0_23 = arith.constant 0 : index
    %33 = vector.load %arg5[%c0_21, %c0_22, %c0_23] : memref<1x4x128xf32, #tpu.memory_space<vmem>>, vector<1x4x128xf32>
    tpu.vector_store %arg5[%c0_21, %c0_22, %c0_23], %32 {strides = array<i32>} : memref<1x4x128xf32, #tpu.memory_space<vmem>>, vector<1x4x128xf32>,
    %c0_24 = arith.constant 0 : index
    %c0_25 = arith.constant 0 : index
    %c0_26 = arith.constant 0 : index
    %34 = vector.load %arg6[%c0_24, %c0_25, %c0_26] : memref<1x4x128xf32, #tpu.memory_space<vmem>>, vector<1x4x128xf32>
    %35 = arith.extui %20 : vector<4x2x128xi1> to vector<4x2x128xi32>
    %36 = arith.sitofp %35 : vector<4x2x128xi32> to vector<4x2x128xf32>
    %cst_27 = arith.constant dense<0.000000e+00> : vector<4x128xf32>
    %37 = vector.multi_reduction <add>, %36, %cst_27 [1] : vector<4x2x128xf32> to vector<4x128xf32>
    %38 = vector.shape_cast %37 : vector<4x128xf32> to vector<1x4x128xf32>
    %39 = arith.addf %34, %38 : vector<1x4x128xf32>
    %c0_28 = arith.constant 0 : index
    %c0_29 = arith.constant 0 : index
    %c0_30 = arith.constant 0 : index
    %40 = vector.load %arg6[%c0_28, %c0_29, %c0_30] : memref<1x4x128xf32, #tpu.memory_space<vmem>>, vector<1x4x128xf32>
    tpu.vector_store %arg6[%c0_28, %c0_29, %c0_30], %39 {strides = array<i32>} : memref<1x4x128xf32, #tpu.memory_space<vmem>>, vector<1x4x128xf32>,
    return
  }
  func.func @transform_0(%arg0: i32, %arg1: i32) -> (i32, i32, i32, i32) {
    %c0_i32 = arith.constant 0 : i32
    %c0_i32_0 = arith.constant 0 : i32
    %c0_i32_1 = arith.constant 0 : i32
    return %arg0, %c0_i32, %arg1, %c0_i32_0 : i32, i32, i32, i32
  }
  func.func @transform_1(%arg0: i32, %arg1: i32) -> (i32, i32, i32, i32) {
    %c0_i32 = arith.constant 0 : i32
    %c0_i32_0 = arith.constant 0 : i32
    %c0_i32_1 = arith.constant 0 : i32
    return %arg0, %c0_i32, %arg1, %c0_i32_0 : i32, i32, i32, i32
  }
  func.func @transform_2(%arg0: i32, %arg1: i32) -> (i32, i32, i32) {
    %c0_i32 = arith.constant 0 : i32
    %c0_i32_0 = arith.constant 0 : i32
    %c0_i32_1 = arith.constant 0 : i32
    return %arg0, %c0_i32, %c0_i32_0 : i32, i32, i32
  }
  func.func @transform_3(%arg0: i32, %arg1: i32) -> (i32, i32, i32) {
    %c0_i32 = arith.constant 0 : i32
    %c0_i32_0 = arith.constant 0 : i32
    %c0_i32_1 = arith.constant 0 : i32
    return %arg0, %c0_i32, %c0_i32_0 : i32, i32, i32
  }
  func.func @transform_4(%arg0: i32, %arg1: i32) -> (i32, i32, i32) {
    %c0_i32 = arith.constant 0 : i32
    %c0_i32_0 = arith.constant 0 : i32
    %c0_i32_1 = arith.constant 0 : i32
    return %arg0, %c0_i32, %c0_i32_0 : i32, i32, i32
  }
}

</mosaic_0001>

<llo_original>
// kernel: tpu_custom_call.1
$region0: #{tpu_custom_call.1}
  #allocation0 [shape = 'u32[]', space=smem, size = 0x4, offset = 0x4, fixed_abs, tag = 'smem constant byte address 0x4 - core index']
  #allocation1 [shape = 'u32[72,128]{1,0:T(1,128)}', space=vmem, size = 0x9000, scoped, tag = 'internal scratch']
  %s0 = inlined_call_operand.hbm [shape: f32[2,4,2,128], index: 0, kind: input, shape index: {}]
  %s1 = inlined_call_operand.hbm [shape: s8[2,1,2,128], index: 1, kind: input, shape index: {}]
  %s2 = inlined_call_operand.hbm [shape: f32[2,4,128], index: 2, kind: output, shape index: {0}]
  %s3 = inlined_call_operand.hbm [shape: f32[2,4,128], index: 3, kind: output, shape index: {1}]
  %s4 = inlined_call_operand.hbm [shape: f32[2,4,128], index: 4, kind: output, shape index: {2}]
  %5 = xla_tuple %s2, %s3, %s4
  %s6 = sld [smem:[#allocation0]]
  $region69: #{tpu_custom_call.1} parent=0
    _
  %s8 = ssub.s32 1, %s6
  %s9 = scalar_select 0, %s8, %s6
  $region1: #{tpu_custom_call.1} parent=0
    #allocation2 [shape = 'u8[8192]{0}', space=vmem, size = 0x2000, scoped, tag = 'input window, operand 0']
    #allocation3 [shape = 's32[2]{0}', space=sflag, size = 0x8, scoped, tag = 'scoped memory for tpu_custom_call.1']
    #allocation4 [shape = 's32[2]{0}', space=sflag, size = 0x8, scoped, tag = 'scoped memory for tpu_custom_call.1']
    #allocation5 [shape = 'u8[1024]{0}', space=vmem, size = 0x400, scoped, tag = 'input window, operand 1']
    #allocation6 [shape = 's32[2]{0}', space=sflag, size = 0x8, scoped, tag = 'scoped memory for tpu_custom_call.1']
    #allocation7 [shape = 'u8[4096]{0}', space=vmem, size = 0x1000, scoped, tag = 'output window, operand 0']
    #allocation8 [shape = 'u8[4096]{0}', space=vmem, size = 0x1000, scoped, tag = 'output window, operand 1']
    #allocation9 [shape = 's32[2]{0}', space=sflag, size = 0x8, scoped, tag = 'scoped memory for tpu_custom_call.1']
    #allocation10 [shape = 'u8[4096]{0}', space=vmem, size = 0x1000, scoped, tag = 'output window, operand 2']
    %10 = vsyncpa [#allocation3], 0
    %s11 = scalar_lea.sflag [#allocation3], 1
    %12 = vsyncpa %s11, 0
    %13 = vsyncpa [#allocation6], 0
    %s14 = scalar_lea.sflag [#allocation6], 1
    %15 = vsyncpa %s14, 0
    %16 = vsyncpa [#allocation4], 0
    %s17 = scalar_lea.sflag [#allocation4], 1
    %18 = vsyncpa %s17, 0
    %19 = vsyncpa [#allocation9], 0
    %s20 = scalar_lea.sflag [#allocation9], 1
    %21 = vsyncpa %s20, 0
    loop: start=0, step=1, limit=4
    $region2: #{tpu_custom_call.1} parent=1 // loop_pre_header
      _
    $region3: #{tpu_custom_call.1} parent=1 // loop_header
      %s23 = sphi 0, %s27
      %p24 = scmp.ge.s32.totalorder %s23, 4
      %s30 = sphi 0, %s42
      %s31 = sphi 0, %s38
      %s32 = sphi 0, %s30
      %s33 = sphi 0, %s31
      %s34 = sphi 0, %s32
      %s35 = sphi 0, %s33
      %s47 = sphi 0, %s49
      %s50 = sphi 0, %s47
      %s51 = sphi 0, %s50
      %s67 = sphi 0, %s51
      %s75 = sphi 0, %s77
      %s78 = sphi 0, %s75
      %s79 = sphi 0, %s78
      %s95 = sphi 0, %s79
      %s101 = sphi 0, %s103
      %s104 = sphi 0, %s101
      %s105 = sphi 0, %s104
      %s121 = sphi 0, %s105
      %s127 = sphi 0, %s129
      %s130 = sphi 0, %s127
      %s131 = sphi 0, %s130
      %s147 = sphi 0, %s131
      %s153 = sphi 0, %s155
      %s156 = sphi 0, %s153
      %s157 = sphi 0, %s156
      %s173 = sphi 0, %s157
    $region4: #{tpu_custom_call.1} parent=1 // loop_header_branch
      %26 = sbr.rel (%p24) target = $region8
    $region5: #{tpu_custom_call.1} parent=1 // loop_body
      %s28 = ssub.s32 %s23, 1
      %s29 = ssub.s32 %s23, 2
      %s36 = sadd.s32 1, %s31
      %p37 = scmp.ge.s32.totalorder %s36, 1
      %s38 = scalar_select %p37, 0, %s36
      %s39 = sadd.s32 1, %s30
      %s40 = scalar_select %p37, %s39, %s30
      %p41 = scmp.ge.s32.totalorder %s40, 2
      %s42 = scalar_select %p41, 0, %s40
      %s43 = ssub.s32 %s30, %s42
      %s44 = ssub.s32 %s31, %s38
      %s45 = sor.u32 %s43, %s44
      %p46 = scmp.eq.s32.totalorder %s45, 0
      %s48 = sadd.s32 %s47, 1
      %s49 = scalar_select %p46, %s47, %s48
      %p52 = pneg %p46
      %p53 = scmp.eq.s32.totalorder %s23, 1
      %p54 = por %p52, %p53
      %p55 = scmp.ne.s32.totalorder %s47, %s50
      %p56 = scmp.eq.s32.totalorder %s23, 0
      %p57 = por %p55, %p56
      %p58 = scmp.ne.s32.totalorder %s47, %s50
      %p59 = scmp.eq.s32.totalorder %s28, 1
      %p60 = por %p58, %p59
      %p61 = scmp.ne.s32.totalorder %s50, %s51
      %p62 = scmp.eq.s32.totalorder %s28, 0
      %p63 = por %p61, %p62
      %p64 = scmp.ne.s32.totalorder %s50, %s51
      %p65 = scmp.eq.s32.totalorder %s29, 1
      %p66 = por %p64, %p65
      %p68 = scmp.ne.s32.totalorder %s51, %s67
      %p69 = scmp.eq.s32.totalorder %s29, 0
      %p70 = por %p68, %p69
      %s71 = ssub.s32 %s30, %s42
      %s72 = ssub.s32 %s31, %s38
      %s73 = sor.u32 %s71, %s72
      %p74 = scmp.eq.s32.totalorder %s73, 0
      %s76 = sadd.s32 %s75, 1
      %s77 = scalar_select %p74, %s75, %s76
      %p80 = pneg %p74
      %p81 = scmp.eq.s32.totalorder %s23, 1
      %p82 = por %p80, %p81
      %p83 = scmp.ne.s32.totalorder %s75, %s78
      %p84 = scmp.eq.s32.totalorder %s23, 0
      %p85 = por %p83, %p84
      %p86 = scmp.ne.s32.totalorder %s75, %s78
      %p87 = scmp.eq.s32.totalorder %s28, 1
      %p88 = por %p86, %p87
      %p89 = scmp.ne.s32.totalorder %s78, %s79
      %p90 = scmp.eq.s32.totalorder %s28, 0
      %p91 = por %p89, %p90
      %p92 = scmp.ne.s32.totalorder %s78, %s79
      %p93 = scmp.eq.s32.totalorder %s29, 1
      %p94 = por %p92, %p93
      %p96 = scmp.ne.s32.totalorder %s79, %s95
      %p97 = scmp.eq.s32.totalorder %s29, 0
      %p98 = por %p96, %p97
      %s99 = ssub.s32 %s30, %s42
      %p100 = scmp.eq.s32.totalorder %s99, 0
      %s102 = sadd.s32 %s101, 1
      %s103 = scalar_select %p100, %s101, %s102
      %p106 = pneg %p100
      %p107 = scmp.eq.s32.totalorder %s23, 1
      %p108 = por %p106, %p107
      %p109 = scmp.ne.s32.totalorder %s101, %s104
      %p110 = scmp.eq.s32.totalorder %s23, 0
      %p111 = por %p109, %p110
      %p112 = scmp.ne.s32.totalorder %s101, %s104
      %p113 = scmp.eq.s32.totalorder %s28, 1
      %p114 = por %p112, %p113
      %p115 = scmp.ne.s32.totalorder %s104, %s105
      %p116 = scmp.eq.s32.totalorder %s28, 0
      %p117 = por %p115, %p116
      %p118 = scmp.ne.s32.totalorder %s104, %s105
      %p119 = scmp.eq.s32.totalorder %s29, 1
      %p120 = por %p118, %p119
      %p122 = scmp.ne.s32.totalorder %s105, %s121
      %p123 = scmp.eq.s32.totalorder %s29, 0
      %p124 = por %p122, %p123
      %s125 = ssub.s32 %s30, %s42
      %p126 = scmp.eq.s32.totalorder %s125, 0
      %s128 = sadd.s32 %s127, 1
      %s129 = scalar_select %p126, %s127, %s128
      %p132 = pneg %p126
      %p133 = scmp.eq.s32.totalorder %s23, 1
      %p134 = por %p132, %p133
      %p135 = scmp.ne.s32.totalorder %s127, %s130
      %p136 = scmp.eq.s32.totalorder %s23, 0
      %p137 = por %p135, %p136
      %p138 = scmp.ne.s32.totalorder %s127, %s130
      %p139 = scmp.eq.s32.totalorder %s28, 1
      %p140 = por %p138, %p139
      %p141 = scmp.ne.s32.totalorder %s130, %s131
      %p142 = scmp.eq.s32.totalorder %s28, 0
      %p143 = por %p141, %p142
      %p144 = scmp.ne.s32.totalorder %s130, %s131
      %p145 = scmp.eq.s32.totalorder %s29, 1
      %p146 = por %p144, %p145
      %p148 = scmp.ne.s32.totalorder %s131, %s147
      %p149 = scmp.eq.s32.totalorder %s29, 0
      %p150 = por %p148, %p149
      %s151 = ssub.s32 %s30, %s42
      %p152 = scmp.eq.s32.totalorder %s151, 0
      %s154 = sadd.s32 %s153, 1
      %s155 = scalar_select %p152, %s153, %s154
      %p158 = pneg %p152
      %p159 = scmp.eq.s32.totalorder %s23, 1
      %p160 = por %p158, %p159
      %p161 = scmp.ne.s32.totalorder %s153, %s156
      %p162 = scmp.eq.s32.totalorder %s23, 0
      %p163 = por %p161, %p162
      %p164 = scmp.ne.s32.totalorder %s153, %s156
      %p165 = scmp.eq.s32.totalorder %s28, 1
      %p166 = por %p164, %p165
      %p167 = scmp.ne.s32.totalorder %s156, %s157
      %p168 = scmp.eq.s32.totalorder %s28, 0
      %p169 = por %p167, %p168
      %p170 = scmp.ne.s32.totalorder %s156, %s157
      %p171 = scmp.eq.s32.totalorder %s29, 1
      %p172 = por %p170, %p171
      %p174 = scmp.ne.s32.totalorder %s157, %s173
      %p175 = scmp.eq.s32.totalorder %s29, 0
      %p176 = por %p174, %p175
      %p177 = scmp.le.s32.totalorder 1, %s23
      %p178 = scmp.lt.s32.totalorder %s23, 3
      %p179 = pnand %p177, %p178
      %p180 = pneg %p179
      // Predicated region
      $region9: #{tpu_custom_call.1} parent=5 // pred_check
        _
      $region10: #{tpu_custom_call.1} parent=5 // pred_check_branch
        %182 = sbr.rel (%p179) target = $region12
      $region11: #{tpu_custom_call.1} parent=5 // pred_region
        %s183 = ssub.s32 %s23, 1
      $region12: #{tpu_custom_call.1} parent=5 // pred_fallthru
        _
      %p184 = scmp.lt.s32.totalorder %s23, 2
      // Predicated region
      $region13: #{tpu_custom_call.1} parent=5 // pred_check
        %p185 = pneg %p184
      $region14: #{tpu_custom_call.1} parent=5 // pred_check_branch
        %187 = sbr.rel (%p185) target = $region16
      $region15: #{tpu_custom_call.1} parent=5 // pred_region
        // Predicated region
        $region17: #{tpu_custom_call.1} parent=15 // pred_check
          %p188 = pneg %p57
        $region18: #{tpu_custom_call.1} parent=15 // pred_check_branch
          %190 = sbr.rel (%p188) target = $region20
        $region19: #{tpu_custom_call.1} parent=15 // pred_region
          %s191 = sand.u32 %s47, 1
          %s192 = scalar_lea.sflag [#allocation3], %s191
          %s193 = sand.u32 %s47, 1
          %s194 = smul.addr %s193, 8
          %s195 = scalar_lea.vmem [#allocation2], %s194
          %197 = vsyncadd %s192, 0
          %s198 = smul.addr %s30, 4
          %s199 = sadd.s32 %s31, %s198
          %s200 = smul.addr %s199, 2
          %s201 = scalar_lea.hbm %s0, %s200
          %s202 = sshll.u32 %s201, 4
          %s203 = int_to_ptr.hbm [resolvable:$true] %s202
          %s204 = sshll.u32 %s195, 4
          %s205 = int_to_ptr.vmem [resolvable:$true] %s204
          %210 = dma.hbm_to_vmem [thread:$0]  %s203, 128, %s205, %s192, 32, 32, 2
        $region20: #{tpu_custom_call.1} parent=15 // pred_fallthru
          _
        // Predicated region
        $region21: #{tpu_custom_call.1} parent=15 // pred_check
          %p211 = pneg %p85
        $region22: #{tpu_custom_call.1} parent=15 // pred_check_branch
          %213 = sbr.rel (%p211) target = $region24
        $region23: #{tpu_custom_call.1} parent=15 // pred_region
          %s214 = sand.u32 %s75, 1
          %s215 = scalar_lea.sflag [#allocation6], %s214
          %s216 = sand.u32 %s75, 1
          %s217 = scalar_lea.vmem [#allocation5], %s216
          %219 = vsyncadd %s215, 0
          %s220 = sadd.s32 %s31, %s30
          %s221 = scalar_lea.hbm %s1, %s220
          %s223 = sshll.u32 %s221, 4
          %s224 = int_to_ptr.hbm [resolvable:$true] %s223
          %s225 = sshll.u32 %s217, 4
          %s226 = int_to_ptr.vmem [resolvable:$true] %s225
          %228 = dma.hbm_to_vmem [thread:$0]  %s224, 16, %s226, %s215
        $region24: #{tpu_custom_call.1} parent=15 // pred_fallthru
          _
      $region16: #{tpu_custom_call.1} parent=5 // pred_fallthru
        _
      %p229 = scmp.le.s32.totalorder 1, %s23
      %p230 = scmp.lt.s32.totalorder %s23, 3
      %p231 = pnand %p229, %p230
      %p232 = pneg %p231
      // Predicated region
      $region25: #{tpu_custom_call.1} parent=5 // pred_check
        _
      $region26: #{tpu_custom_call.1} parent=5 // pred_check_branch
        %234 = sbr.rel (%p231) target = $region28
      $region27: #{tpu_custom_call.1} parent=5 // pred_region
        %s235 = ssub.s32 %s23, 1
        %s236 = sand.u32 %s50, 1
        %s237 = scalar_lea.sflag [#allocation3], %s236
        %s238 = sand.u32 %s50, 1
        %s239 = smul.addr %s238, 8
        %s240 = scalar_lea.vmem [#allocation2], %s239
        // Predicated region
        $region29: #{tpu_custom_call.1} parent=27 // pred_check
          %p241 = pneg %p63
        $region30: #{tpu_custom_call.1} parent=27 // pred_check_branch
          %243 = sbr.rel (%p241) target = $region32
        $region31: #{tpu_custom_call.1} parent=27 // pred_region
          %245 = dma.done %s237, 128
        $region32: #{tpu_custom_call.1} parent=27 // pred_fallthru
          _
        %s246 = sand.u32 %s78, 1
        %s247 = scalar_lea.sflag [#allocation6], %s246
        %s248 = sand.u32 %s78, 1
        %s249 = scalar_lea.vmem [#allocation5], %s248
        // Predicated region
        $region33: #{tpu_custom_call.1} parent=27 // pred_check
          %p250 = pneg %p91
        $region34: #{tpu_custom_call.1} parent=27 // pred_check_branch
          %252 = sbr.rel (%p250) target = $region36
        $region35: #{tpu_custom_call.1} parent=27 // pred_region
          %254 = dma.done %s247, 16
        $region36: #{tpu_custom_call.1} parent=27 // pred_fallthru
          _
        %s255 = sand.u32 %s50, 1
        %s256 = scalar_lea.sflag [#allocation3], %s255
        %s257 = sand.u32 %s50, 1
        %s258 = smul.addr %s257, 8
        %s259 = scalar_lea.vmem [#allocation2], %s258
        %p260 = pneg %p63
        %p261 = pneg %p60
        %s262 = sand.u32 %s78, 1
        %s263 = scalar_lea.sflag [#allocation6], %s262
        %s264 = sand.u32 %s78, 1
        %s265 = scalar_lea.vmem [#allocation5], %s264
        %p266 = pneg %p91
        %p267 = pneg %p88
        %p268 = pneg %p117
        %p269 = pneg %p114
        %s270 = sand.u32 %s104, 1
        %s271 = scalar_lea.sflag [#allocation4], %s270
        %s272 = sand.u32 %s104, 1
        %s273 = smul.addr %s272, 4
        %s274 = scalar_lea.vmem [#allocation7], %s273
        %p275 = pneg %p143
        %p276 = pneg %p140
        %s277 = sand.u32 %s28, 1
        %s278 = scalar_lea.sflag [#allocation9], %s277
        %s279 = sand.u32 %s130, 1
        %s280 = smul.addr %s279, 4
        %s281 = scalar_lea.vmem [#allocation8], %s280
        %p282 = pneg %p169
        %p283 = pneg %p166
        %s284 = sand.u32 %s28, 1
        %s285 = scalar_lea.sflag [#allocation9], %s284
        %s286 = sand.u32 %s156, 1
        %s287 = smul.addr %s286, 4
        %s288 = scalar_lea.vmem [#allocation10], %s287
        %p289 = scmp.eq.s32.totalorder %s33, 0
        // Predicated region
        $region37: #{tpu_custom_call.1} parent=27 // pred_check
          %p290 = pneg %p289
        $region38: #{tpu_custom_call.1} parent=27 // pred_check_branch
          %292 = sbr.rel (%p290) target = $region40
        $region39: #{tpu_custom_call.1} parent=27 // pred_region
          %293 = vst [vmem:[%s274] sm:$0xf] 0.0
          %294 = vst [vmem:[%s281] sm:$0xf] 0.0
          %295 = vst [vmem:[%s288] sm:$0xf] 0.0
        $region40: #{tpu_custom_call.1} parent=27 // pred_fallthru
          _
        %v296 = vld [vmem:[%s240] sm:$0x3]
        %v297 = vld [vmem:[%s240 + $0x2] sm:$0x3]
        %v298 = vld [vmem:[%s240 + $0x4] sm:$0x3]
        %v299 = vld [vmem:[%s240 + $0x6] sm:$0x3]
        %v300 = vld [vmem:[%s249] sm:$0x1]
        %v301 = vunpack.c.0.s8 %v300
        %vm302 = vcmask 1041408
        %v303 = vsel %vm302, %v296, -inf
        %v304 = vsel %vm302, %v297, -inf
        %v305 = vsel %vm302, %v298, -inf
        %v306 = vsel %vm302, %v299, -inf
        %v307 = vmax.f32 %v303, %v304
        %v308 = vmax.f32 %v305, %v306
        %v309 = vmax.f32 %v307, %v308
        %v310 = vsub.f32 %v296, %v309
        %v311 = vsub.f32 %v297, %v309
        %v312 = vsub.f32 %v298, %v309
        %v313 = vsub.f32 %v299, %v309
        %v314 = vmul.f32 %v310, 1.442695
        %v315 = vpow.pop %v314
        %v316 = vmul.f32 %v311, 1.442695
        %v317 = vpow.pop %v316
        %v318 = vmul.f32 %v312, 1.442695
        %v319 = vpow.pop %v318
        %v320 = vmul.f32 %v313, 1.442695
        %v321 = vpow.pop %v320
        %v322 = vsel %vm302, %v315, 0.0
        %v323 = vsel %vm302, %v317, 0.0
        %v324 = vadd.f32 %v322, %v323
        %v325 = vsel %vm302, %v319, 0.0
        %v326 = vadd.f32 %v324, %v325
        %v327 = vsel %vm302, %v321, 0.0
        %v328 = vadd.f32 %v326, %v327
        %v329 = vrcp.pop %v328
        %v330 = vmul.f32 %v328, %v329
        %v331 = vsub.f32 1.0, %v330
        %v332 = vmul.f32 %v329, %v331
        %v333 = vadd.f32 %v329, %v332
        %vm334 = vweird.f32 %v328
        %vm335 = vweird.f32 %v329
        %vm336 = vmor %vm334, %vm335
        %v337 = vsel %vm336, %v329, %v333
        %v338 = vand.u32 2147483647, %v328
        %vm339 = vcmp.eq.f32.partialorder %v338, 8.507059e+37
        %v340 = vand.u32 %v328, 2147483648
        %v341 = vor.u32 1.1754944e-38, %v340
        %v342 = vsel %vm339, %v341, %v337
        %v343 = vmul.f32 %v315, %v342
        %v344 = vmul.f32 %v317, %v342
        %v345 = vmul.f32 %v319, %v342
        %v346 = vmul.f32 %v321, %v342
        %vm347 = vcmp.eq.s32.totalorder %v301, 0
        %vm348 = vcmp.eq.s32.totalorder %v301, 1
        %vm349 = vcmp.eq.s32.totalorder %v301, 2
        %vm350 = vcmp.eq.s32.totalorder %v301, 3
        %v351 = vld [vmem:[%s274] sm:$0xf]
        %v352 = vsel %vm347, %v343, 0.0
        %v353 = vsel %vm348, %v344, 0.0
        %v354 = vsel %vm349, %v345, 0.0
        %v355 = vsel %vm350, %v346, 0.0
        %v356 = vsel %vm302, %v352, 0.0
        %v357 = vrot.slane %v356, 4
        %v358 = vadd.f32 %v356, %v357
        %v359 = vrot.slane %v358, 2
        %v360 = vadd.f32 %v358, %v359
        %v361 = vrot.slane %v360, 1
        %v362 = vadd.f32 %v360, %v361
        %v363 = vsel %vm302, %v353, 0.0
        %v364 = vrot.slane %v363, 4
        %v365 = vadd.f32 %v363, %v364
        %v366 = vrot.slane %v365, 2
        %v367 = vadd.f32 %v365, %v366
        %v368 = vrot.slane %v367, 1
        %v369 = vadd.f32 %v367, %v368
        %v370 = vsel %vm302, %v354, 0.0
        %v371 = vrot.slane %v370, 4
        %v372 = vadd.f32 %v370, %v371
        %v373 = vrot.slane %v372, 2
        %v374 = vadd.f32 %v372, %v373
        %v375 = vrot.slane %v374, 1
        %v376 = vadd.f32 %v374, %v375
        %v377 = vsel %vm302, %v355, 0.0
        %v378 = vrot.slane %v377, 4
        %v379 = vadd.f32 %v377, %v378
        %v380 = vrot.slane %v379, 2
        %v381 = vadd.f32 %v379, %v380
        %v382 = vrot.slane %v381, 1
        %v383 = vadd.f32 %v381, %v382
        %vm388 = vcmask 1041409
        %v389 = vsel %vm388, %v369, %v362
        %vm390 = vcmask 1042434
        %v391 = vsel %vm390, %v376, %v389
        %vm392 = vcmask 1043459
        %v393 = vsel %vm392, %v383, %v391
        %v395 = vadd.f32 %v351, %v393
        %396 = vst [vmem:[%s274] sm:$0xf] %v395
        %v397 = vld [vmem:[%s281] sm:$0xf]
        %v398 = vmul.f32 %v343, %v343
        %v399 = vmul.f32 %v344, %v344
        %v400 = vmul.f32 %v345, %v345
        %v401 = vmul.f32 %v346, %v346
        %v402 = vsel %vm302, %v398, 0.0
        %v403 = vrot.slane %v402, 4
        %v404 = vadd.f32 %v402, %v403
        %v405 = vrot.slane %v404, 2
        %v406 = vadd.f32 %v404, %v405
        %v407 = vrot.slane %v406, 1
        %v408 = vadd.f32 %v406, %v407
        %v409 = vsel %vm302, %v399, 0.0
        %v410 = vrot.slane %v409, 4
        %v411 = vadd.f32 %v409, %v410
        %v412 = vrot.slane %v411, 2
        %v413 = vadd.f32 %v411, %v412
        %v414 = vrot.slane %v413, 1
        %v415 = vadd.f32 %v413, %v414
        %v416 = vsel %vm302, %v400, 0.0
        %v417 = vrot.slane %v416, 4
        %v418 = vadd.f32 %v416, %v417
        %v419 = vrot.slane %v418, 2
        %v420 = vadd.f32 %v418, %v419
        %v421 = vrot.slane %v420, 1
        %v422 = vadd.f32 %v420, %v421
        %v423 = vsel %vm302, %v401, 0.0
        %v424 = vrot.slane %v423, 4
        %v425 = vadd.f32 %v423, %v424
        %v426 = vrot.slane %v425, 2
        %v427 = vadd.f32 %v425, %v426
        %v428 = vrot.slane %v427, 1
        %v429 = vadd.f32 %v427, %v428
        %v434 = vsel %vm388, %v415, %v408
        %v435 = vsel %vm390, %v422, %v434
        %v436 = vsel %vm392, %v429, %v435
        %v438 = vadd.f32 %v397, %v436
        %439 = vst [vmem:[%s281] sm:$0xf] %v438
        %v440 = vld [vmem:[%s288] sm:$0xf]
        %v441 = vsel %vm347, 1, 0
        %v442 = vsel %vm348, 1, 0
        %v443 = vsel %vm349, 1, 0
        %v444 = vsel %vm350, 1, 0
        %v445 = vcvt.s32.f32 %v441
        %v446 = vcvt.s32.f32 %v442
        %v447 = vcvt.s32.f32 %v443
        %v448 = vcvt.s32.f32 %v444
        %v449 = vsel %vm302, %v445, 0.0
        %v450 = vrot.slane %v449, 4
        %v451 = vadd.f32 %v449, %v450
        %v452 = vrot.slane %v451, 2
        %v453 = vadd.f32 %v451, %v452
        %v454 = vrot.slane %v453, 1
        %v455 = vadd.f32 %v453, %v454
        %v456 = vsel %vm302, %v446, 0.0
        %v457 = vrot.slane %v456, 4
        %v458 = vadd.f32 %v456, %v457
        %v459 = vrot.slane %v458, 2
        %v460 = vadd.f32 %v458, %v459
        %v461 = vrot.slane %v460, 1
        %v462 = vadd.f32 %v460, %v461
        %v463 = vsel %vm302, %v447, 0.0
        %v464 = vrot.slane %v463, 4
        %v465 = vadd.f32 %v463, %v464
        %v466 = vrot.slane %v465, 2
        %v467 = vadd.f32 %v465, %v466
        %v468 = vrot.slane %v467, 1
        %v469 = vadd.f32 %v467, %v468
        %v470 = vsel %vm302, %v448, 0.0
        %v471 = vrot.slane %v470, 4
        %v472 = vadd.f32 %v470, %v471
        %v473 = vrot.slane %v472, 2
        %v474 = vadd.f32 %v472, %v473
        %v475 = vrot.slane %v474, 1
        %v476 = vadd.f32 %v474, %v475
        %v481 = vsel %vm388, %v462, %v455
        %v482 = vsel %vm390, %v469, %v481
        %v483 = vsel %vm392, %v476, %v482
        %v485 = vadd.f32 %v440, %v483
        %486 = vst [vmem:[%s288] sm:$0xf] %v485
        %s487 = sand.u32 %s104, 1
        %s488 = scalar_lea.sflag [#allocation4], %s487
        %s489 = sand.u32 %s104, 1
        %s490 = smul.addr %s489, 4
        %s491 = scalar_lea.vmem [#allocation7], %s490
        %s492 = sand.u32 %s28, 1
        %s493 = scalar_lea.sflag [#allocation9], %s492
        %s494 = sand.u32 %s130, 1
        %s495 = smul.addr %s494, 4
        %s496 = scalar_lea.vmem [#allocation8], %s495
        %s497 = sand.u32 %s28, 1
        %s498 = scalar_lea.sflag [#allocation9], %s497
        %s499 = sand.u32 %s156, 1
        %s500 = smul.addr %s499, 4
        %s501 = scalar_lea.vmem [#allocation10], %s500
        // Predicated region
        $region41: #{tpu_custom_call.1} parent=27 // pred_check
          %p502 = pneg %p114
        $region42: #{tpu_custom_call.1} parent=27 // pred_check_branch
          %504 = sbr.rel (%p502) target = $region44
        $region43: #{tpu_custom_call.1} parent=27 // pred_region
          %506 = vsyncadd %s488, 0
          %s507 = smul.addr %s32, 4
          %s508 = scalar_lea.hbm %s2, %s507
          %s510 = sshll.u32 %s491, 4
          %s511 = int_to_ptr.vmem [resolvable:$true] %s510
          %s512 = sshll.u32 %s508, 4
          %s513 = int_to_ptr.hbm [resolvable:$true] %s512
          %515 = dma.vmem_to_hbm [thread:$0]  %s511, 64, %s513, %s488
        $region44: #{tpu_custom_call.1} parent=27 // pred_fallthru
          _
        // Predicated region
        $region45: #{tpu_custom_call.1} parent=27 // pred_check
          %p516 = pneg %p140
        $region46: #{tpu_custom_call.1} parent=27 // pred_check_branch
          %518 = sbr.rel (%p516) target = $region48
        $region47: #{tpu_custom_call.1} parent=27 // pred_region
          %520 = vsyncadd %s493, 0
          %s521 = smul.addr %s32, 4
          %s522 = scalar_lea.hbm %s3, %s521
          %s524 = sshll.u32 %s496, 4
          %s525 = int_to_ptr.vmem [resolvable:$true] %s524
          %s526 = sshll.u32 %s522, 4
          %s527 = int_to_ptr.hbm [resolvable:$true] %s526
          %529 = dma.vmem_to_hbm [thread:$0]  %s525, 64, %s527, %s493
        $region48: #{tpu_custom_call.1} parent=27 // pred_fallthru
          _
        // Predicated region
        $region49: #{tpu_custom_call.1} parent=27 // pred_check
          %p530 = pneg %p166
        $region50: #{tpu_custom_call.1} parent=27 // pred_check_branch
          %532 = sbr.rel (%p530) target = $region52
        $region51: #{tpu_custom_call.1} parent=27 // pred_region
          %534 = vsyncadd %s498, 0
          %s535 = smul.addr %s32, 4
          %s536 = scalar_lea.hbm %s4, %s535
          %s538 = sshll.u32 %s501, 4
          %s539 = int_to_ptr.vmem [resolvable:$true] %s538
          %s540 = sshll.u32 %s536, 4
          %s541 = int_to_ptr.hbm [resolvable:$true] %s540
          %543 = dma.vmem_to_hbm [thread:$0]  %s539, 64, %s541, %s498
        $region52: #{tpu_custom_call.1} parent=27 // pred_fallthru
          _
      $region28: #{tpu_custom_call.1} parent=5 // pred_fallthru
        _
      %p544 = scmp.le.s32.totalorder 2, %s23
      // Predicated region
      $region53: #{tpu_custom_call.1} parent=5 // pred_check
        %p545 = pneg %p544
      $region54: #{tpu_custom_call.1} parent=5 // pred_check_branch
        %547 = sbr.rel (%p545) target = $region56
      $region55: #{tpu_custom_call.1} parent=5 // pred_region
        %s548 = ssub.s32 %s23, 2
        // Predicated region
        $region57: #{tpu_custom_call.1} parent=55 // pred_check
          %p549 = pneg %p120
        $region58: #{tpu_custom_call.1} parent=55 // pred_check_branch
          %551 = sbr.rel (%p549) target = $region60
        $region59: #{tpu_custom_call.1} parent=55 // pred_region
          %s552 = sand.u32 %s105, 1
          %s553 = scalar_lea.sflag [#allocation4], %s552
          %s554 = sand.u32 %s105, 1
          %s555 = smul.addr %s554, 4
          %s556 = scalar_lea.vmem [#allocation7], %s555
          %558 = dma.done %s553, 64
        $region60: #{tpu_custom_call.1} parent=55 // pred_fallthru
          _
        // Predicated region
        $region61: #{tpu_custom_call.1} parent=55 // pred_check
          %p559 = pneg %p146
        $region62: #{tpu_custom_call.1} parent=55 // pred_check_branch
          %561 = sbr.rel (%p559) target = $region64
        $region63: #{tpu_custom_call.1} parent=55 // pred_region
          %s562 = sand.u32 %s29, 1
          %s563 = scalar_lea.sflag [#allocation9], %s562
          %s564 = sand.u32 %s131, 1
          %s565 = smul.addr %s564, 4
          %s566 = scalar_lea.vmem [#allocation8], %s565
          %568 = dma.done %s563, 64
        $region64: #{tpu_custom_call.1} parent=55 // pred_fallthru
          _
        // Predicated region
        $region65: #{tpu_custom_call.1} parent=55 // pred_check
          %p569 = pneg %p172
        $region66: #{tpu_custom_call.1} parent=55 // pred_check_branch
          %571 = sbr.rel (%p569) target = $region68
        $region67: #{tpu_custom_call.1} parent=55 // pred_region
          %s572 = sand.u32 %s29, 1
          %s573 = scalar_lea.sflag [#allocation9], %s572
          %s574 = sand.u32 %s157, 1
          %s575 = smul.addr %s574, 4
          %s576 = scalar_lea.vmem [#allocation10], %s575
          %578 = dma.done %s573, 64
        $region68: #{tpu_custom_call.1} parent=55 // pred_fallthru
          _
      $region56: #{tpu_custom_call.1} parent=5 // pred_fallthru
        _
    $region6: #{tpu_custom_call.1} parent=1 // loop_footer
      %s27 = sadd.s32 1, %s23
    $region7: #{tpu_custom_call.1} parent=1 // loop_footer_branch
      %22 = sbr.rel target = $region3
    $region8: #{tpu_custom_call.1} parent=1 // loop_exit
      _
    %579 = vsyncpa [#allocation3], 1
    %s580 = scalar_lea.sflag [#allocation3], 1
    %581 = vsyncpa %s580, 1
    %582 = vsyncpa [#allocation6], 1
    %s583 = scalar_lea.sflag [#allocation6], 1
    %584 = vsyncpa %s583, 1
    %585 = vsyncpa [#allocation4], 1
    %s586 = scalar_lea.sflag [#allocation4], 1
    %587 = vsyncpa %s586, 1
    %588 = vsyncpa [#allocation9], 1
    %s589 = scalar_lea.sflag [#allocation9], 1
    %590 = vsyncpa %s589, 1

</llo_original>
